<compile_context>
chip_gen: v7x
topology: tpu7x:2x2x1
jax: 0.10.0
libtpu: 0.0.40
codegen_flags: <defaults>
</compile_context>

<pallas_src>
import functools

import jax
import jax.numpy as jnp
from jax.experimental import pallas as pl
from jax.experimental.pallas import tpu as pltpu


_TAPS = tuple((dy, dx) for dy in (-1, 0, 1) for dx in (-1, 0, 1))
_CENTER = 4  # index of the (0, 0) tap in _TAPS


def _pa_kernel(W, x_ref, masks_ref, w1_ref, b1_ref, w2_ref, b2_ref, o_ref):
    """One image per grid step.

    x_ref     : (C, HW)       input, caller dtype (spatial axis on lanes)
    masks_ref : (9, HW) f32   per-tap {0,1} validity masks ("same" padding)
    w1_ref    : (9*Cm, C)     conv1 weights, tap-major / out-channel-minor
    b1_ref    : (Cm, 1) f32   conv1 bias
    w2_ref    : (9, Cm) f32   conv2 weights, tap-major
    b2_ref    : (1,) f32 SMEM conv2 bias (scalar)
    o_ref     : (C, HW)       output, caller dtype
    """
    C, HW = x_ref.shape
    Cm = b1_ref.shape[0]

    x = x_ref[...]                                # caller dtype, single read
    masks = masks_ref[...]                        # (9, HW) f32

    def tap_roll(v, t):
        # v[..., p] -> v[..., p + d_t]; out-of-image positions are killed by
        # the masks, so the cyclic wraparound is harmless.
        dy, dx = _TAPS[t]
        d = dy * W + dx
        if d == 0:
            return v
        return pltpu.roll(v, (-d) % HW, 1)

    # ---- conv1 (C -> Cm), commuted: one MXU matmul, then tiny rolls ---------
    x_mm = x if x.dtype == w1_ref.dtype else x.astype(w1_ref.dtype)
    z1 = jnp.dot(w1_ref[...], x_mm,
                 preferred_element_type=jnp.float32)          # (9*Cm, HW) f32

    acc1 = z1[_CENTER * Cm:(_CENTER + 1) * Cm, :]             # center tap: mask == 1
    for t in range(len(_TAPS)):
        if t == _CENTER:
            continue
        zt = tap_roll(z1[t * Cm:(t + 1) * Cm, :], t)          # (Cm, HW)
        acc1 = acc1 + zt * masks[t:t + 1, :]
    mid = jnp.maximum(acc1 + b1_ref[...], 0.0)                # bias + ReLU, (Cm, HW)

    # ---- conv2 (Cm -> 1), commuted: small MXU matmul, then (1, HW) rolls ----
    z2 = jnp.dot(w2_ref[...], mid,
                 preferred_element_type=jnp.float32)          # (9, HW) f32

    y = z2[_CENTER:_CENTER + 1, :]
    for t in range(len(_TAPS)):
        if t == _CENTER:
            continue
        y = y + tap_roll(z2[t:t + 1, :], t) * masks[t:t + 1, :]
    y = jax.nn.sigmoid(y + b2_ref[0])                         # (1, HW) f32

    # ---- epilogue: out = x * y, broadcast over channels, lane-dense store ---
    if x.dtype == jnp.bfloat16:
        o_ref[...] = (x * y.astype(jnp.bfloat16)).astype(o_ref.dtype)
    else:
        o_ref[...] = (x.astype(jnp.float32) * y).astype(o_ref.dtype)


def _vmem_limit_bytes(needed_bytes):
    """Generation-aware scoped-VMEM limit (v7x: 64 MiB physical, v5e/v6e: 128)."""
    try:
        phys = int(pltpu.get_tpu_info().vmem_capacity_bytes)
    except Exception:
        phys = 64 * 1024 * 1024                   # conservative fallback (v7x)
    budget = (phys * 3) // 4                      # headroom for compiler scratch
    want = max(32 * 1024 * 1024, int(needed_bytes))
    return int(min(budget, want))


@jax.jit
def pa_layer(x_nchw, w1, b1, w2, b2):
    """PALayer forward.

    x_nchw : (N, C, H, W), float dtype (f32 or bf16).
    w1     : (3, 3, C, C//8)  first conv weights, layout (ky, kx, Cin, Cout).
    b1     : (C//8,)
    w2     : (3, 3, C//8, 1)  second conv weights.
    b2     : (1,)
    """
    N, C, H, W = x_nchw.shape
    Cm = w1.shape[3]
    HW = H * W

    # Free reshape: NCHW row-major == (N, C, H*W); spatial axis goes to lanes.
    x3 = x_nchw.reshape(N, C, HW)

    # Per-tap {0,1} validity masks for "same" padding (tiny, built once).
    p = jnp.arange(HW, dtype=jnp.int32)
    ii = p // W
    jj = p % W
    masks = jnp.stack(
        [((ii + dy >= 0) & (ii + dy < H) & (jj + dx >= 0) & (jj + dx < W))
         for dy, dx in _TAPS],
        axis=0).astype(jnp.float32)                                   # (9, HW)

    # MXU input dtype: keep bf16 end-to-end for bf16 callers (v6e/v7x native),
    # otherwise compute in f32.
    mxu_dtype = jnp.bfloat16 if x_nchw.dtype == jnp.bfloat16 else jnp.float32

    # conv1 weights -> (9*Cm, C), tap-major / out-channel-minor.
    w1r = jnp.transpose(w1, (0, 1, 3, 2)).reshape(9 * Cm, C).astype(mxu_dtype)
    b1c = b1.reshape(Cm, 1).astype(jnp.float32)
    # conv2 weights -> (9, Cm), tap-major; bias as an SMEM scalar.
    w2r = w2.reshape(9, Cm).astype(jnp.float32)
    b2f = b2.reshape(1).astype(jnp.float32)

    itemsize = x_nchw.dtype.itemsize
    # Rough per-step VMEM need: double-buffered in/out blocks, masks + weights,
    # and f32 temporaries (z1, acc1/mid, z2, y, rolled slices).
    block_bytes = C * HW * itemsize
    temp_bytes = (9 * Cm + 3 * Cm + 2 * 9 + 4) * HW * 4 + C * HW * 4
    weight_bytes = (9 * Cm * C + 10 * Cm + 16) * 4 + 2 * 9 * HW * 4
    needed = 4 * block_bytes + temp_bytes + weight_bytes + (4 << 20)
    # TODO(synk): for images where a single (C, H*W) block exceeds the VMEM
    # budget (or when N < 4 on v7x's two TensorCores), add a row-tiled grid
    # axis with a one-row halo; the precomputed masks already support it.

    flops = N * HW * (2 * 9 * Cm * C + 2 * 9 * Cm + 6 * 9 * Cm + 6 * 9 + C + 3 * Cm)
    bytes_accessed = (2 * N * C * HW * itemsize
                      + masks.size * 4
                      + (w1r.size + b1c.size + w2r.size + b2f.size) * 4)

    out3 = pl.pallas_call(
        functools.partial(_pa_kernel, W),
        out_shape=jax.ShapeDtypeStruct((N, C, HW), x_nchw.dtype),
        grid_spec=pltpu.PrefetchScalarGridSpec(
            num_scalar_prefetch=0,
            grid=(N,),                                   # one image per step
            in_specs=[
                pl.BlockSpec((None, C, HW), lambda n: (n, 0, 0)),    # x
                pl.BlockSpec((9, HW), lambda n: (0, 0)),             # tap masks
                pl.BlockSpec((9 * Cm, C), lambda n: (0, 0)),         # conv1 weights
                pl.BlockSpec((Cm, 1), lambda n: (0, 0)),             # conv1 bias
                pl.BlockSpec((9, Cm), lambda n: (0, 0)),             # conv2 weights
                pl.BlockSpec(memory_space=pltpu.MemorySpace.SMEM),   # conv2 bias
            ],
            out_specs=pl.BlockSpec((None, C, HW), lambda n: (n, 0, 0)),
        ),
        compiler_params=pltpu.CompilerParams(
            dimension_semantics=("parallel",),
            vmem_limit_bytes=_vmem_limit_bytes(needed),
        ),
        cost_estimate=pl.CostEstimate(
            flops=int(flops),
            transcendentals=int(N * HW),
            bytes_accessed=int(bytes_accessed),
        ),
    )(x3, masks, w1r, b1c, w2r, b2f)

    return out3.reshape(N, C, H, W)


def _reference_pa_layer(x_nchw, w1, b1, w2, b2):
    """Pure-JAX reference (lax conv, NCHW) for verification."""
    w1_oihw = jnp.transpose(w1, (3, 2, 0, 1))
    w2_oihw = jnp.transpose(w2, (3, 2, 0, 1))
    y = jax.lax.conv_general_dilated(
        x_nchw, w1_oihw, (1, 1), ((1, 1), (1, 1)),
        dimension_numbers=("NCHW", "OIHW", "NCHW"))
    y = jax.nn.relu(y + b1.reshape(1, -1, 1, 1))
    y = jax.lax.conv_general_dilated(
        y, w2_oihw, (1, 1), ((1, 1), (1, 1)),
        dimension_numbers=("NCHW", "OIHW", "NCHW"))
    y = jax.nn.sigmoid(y + b2.reshape(1, -1, 1, 1))
    return x_nchw * y


if __name__ == "__main__":
    # Small shapes consistent with the module (channel must be >= 8 for channel//8).
    N, C, H, W = 2, 16, 16, 16
    Cm = C // 8

    key = jax.random.PRNGKey(0)
    kx, kw1, kb1, kw2, kb2 = jax.random.split(key, 5)

    x = jax.random.normal(kx, (N, C, H, W), dtype=jnp.float32)
    # PyTorch shapes would be conv1 (Cm, C, 3, 3) and conv2 (1, Cm, 3, 3);
    # stored here as (ky, kx, Cin, Cout).
    w1 = 0.1 * jax.random.normal(kw1, (3, 3, C, Cm), dtype=jnp.float32)
    b1 = 0.1 * jax.random.normal(kb1, (Cm,), dtype=jnp.float32)
    w2 = 0.1 * jax.random.normal(kw2, (3, 3, Cm, 1), dtype=jnp.float32)
    b2 = 0.1 * jax.random.normal(kb2, (1,), dtype=jnp.float32)

    out = jax.block_until_ready(pa_layer(x, w1, b1, w2, b2))
    ref = _reference_pa_layer(x, w1, b1, w2, b2)

    assert out.shape == (N, C, H, W)
    assert out.dtype == x.dtype
    assert jnp.allclose(out, ref, atol=2e-3, rtol=2e-3), "mismatch vs reference"

    print("KERNEL_OK")
</pallas_src>

<mosaic_0001>
module attributes {stable_mosaic.version = 11 : i64} {
  func.func @_pa_kernel(%arg0: i32, %arg1: memref<1x16x256xf32, #tpu.memory_space<vmem>>, %arg2: memref<9x256xf32, #tpu.memory_space<vmem>>, %arg3: memref<18x16xf32, #tpu.memory_space<vmem>>, %arg4: memref<2x1xf32, #tpu.memory_space<vmem>>, %arg5: memref<9x2xf32, #tpu.memory_space<vmem>>, %arg6: memref<1xf32, #tpu.memory_space<smem>>, %arg7: memref<1x16x256xf32, #tpu.memory_space<vmem>>) attributes {dimension_semantics = [#tpu.dimension_semantics<parallel>], iteration_bounds = array<i64: 2>, scalar_prefetch = 0 : i64, scratch_operands = 0 : i64, tpu.core_type = #tpu.core_type<tc>, window_params = [{transform_indices = @transform_0, window_bounds = array<i64: 1, 16, 256>}, {pipeline_mode = #tpu.pipeline_mode<synchronous>, transform_indices = @transform_1, window_bounds = array<i64: 9, 256>}, {pipeline_mode = #tpu.pipeline_mode<synchronous>, transform_indices = @transform_2, window_bounds = array<i64: 18, 16>}, {pipeline_mode = #tpu.pipeline_mode<synchronous>, transform_indices = @transform_3, window_bounds = array<i64: 2, 1>}, {pipeline_mode = #tpu.pipeline_mode<synchronous>, transform_indices = @transform_4, window_bounds = array<i64: 9, 2>}, {transform_indices = @transform_5, window_bounds = array<i64: 1>}, {transform_indices = @transform_6, window_bounds = array<i64: 1, 16, 256>}]} {
    %c0 = arith.constant 0 : index
    %c0_0 = arith.constant 0 : index
    %c0_1 = arith.constant 0 : index
    %0 = vector.load %arg1[%c0, %c0_0, %c0_1] : memref<1x16x256xf32, #tpu.memory_space<vmem>>, vector<1x16x256xf32>
    %1 = vector.shape_cast %0 : vector<1x16x256xf32> to vector<16x256xf32>
    %c0_2 = arith.constant 0 : index
    %c0_3 = arith.constant 0 : index
    %2 = vector.load %arg2[%c0_2, %c0_3] : memref<9x256xf32, #tpu.memory_space<vmem>>, vector<9x256xf32>
    %c0_4 = arith.constant 0 : index
    %c0_5 = arith.constant 0 : index
    %3 = vector.load %arg3[%c0_4, %c0_5] : memref<18x16xf32, #tpu.memory_space<vmem>>, vector<18x16xf32>
    %cst = arith.constant dense<0.000000e+00> : vector<18x256xf32>
    %4 = tpu.matmul %3, %1, %cst {dimension_numbers = #tpu.dot_dimension_numbers<[1], [0], [0], [1], [0, 0, 1, 1], [], []>} : vector<18x16xf32>, vector<16x256xf32>, vector<18x256xf32> -> vector<18x256xf32>
    %5 = vector.extract_strided_slice %4 {offsets = [8, 0], sizes = [2, 256], strides = [1, 1]} : vector<18x256xf32> to vector<2x256xf32>
    %6 = vector.extract_strided_slice %4 {offsets = [0, 0], sizes = [2, 256], strides = [1, 1]} : vector<18x256xf32> to vector<2x256xf32>
    %c17_i32 = arith.constant 17 : i32
    %7 = tpu.dynamic_rotate %6 by %c17_i32 dim 1 : vector<2x256xf32>, i32 -> vector<2x256xf32>
    %8 = vector.extract_strided_slice %2 {offsets = [0, 0], sizes = [1, 256], strides = [1, 1]} : vector<9x256xf32> to vector<1x256xf32>
    %9 = vector.broadcast %8 : vector<1x256xf32> to vector<2x256xf32>
    %10 = arith.mulf %7, %9 : vector<2x256xf32>
    %11 = arith.addf %5, %10 : vector<2x256xf32>
    %12 = vector.extract_strided_slice %4 {offsets = [2, 0], sizes = [2, 256], strides = [1, 1]} : vector<18x256xf32> to vector<2x256xf32>
    %c16_i32 = arith.constant 16 : i32
    %13 = tpu.dynamic_rotate %12 by %c16_i32 dim 1 : vector<2x256xf32>, i32 -> vector<2x256xf32>
    %14 = vector.extract_strided_slice %2 {offsets = [1, 0], sizes = [1, 256], strides = [1, 1]} : vector<9x256xf32> to vector<1x256xf32>
    %15 = vector.broadcast %14 : vector<1x256xf32> to vector<2x256xf32>
    %16 = arith.mulf %13, %15 : vector<2x256xf32>
    %17 = arith.addf %11, %16 : vector<2x256xf32>
    %18 = vector.extract_strided_slice %4 {offsets = [4, 0], sizes = [2, 256], strides = [1, 1]} : vector<18x256xf32> to vector<2x256xf32>
    %c15_i32 = arith.constant 15 : i32
    %19 = tpu.dynamic_rotate %18 by %c15_i32 dim 1 : vector<2x256xf32>, i32 -> vector<2x256xf32>
    %20 = vector.extract_strided_slice %2 {offsets = [2, 0], sizes = [1, 256], strides = [1, 1]} : vector<9x256xf32> to vector<1x256xf32>
    %21 = vector.broadcast %20 : vector<1x256xf32> to vector<2x256xf32>
    %22 = arith.mulf %19, %21 : vector<2x256xf32>
    %23 = arith.addf %17, %22 : vector<2x256xf32>
    %24 = vector.extract_strided_slice %4 {offsets = [6, 0], sizes = [2, 256], strides = [1, 1]} : vector<18x256xf32> to vector<2x256xf32>
    %c1_i32 = arith.constant 1 : i32
    %25 = tpu.dynamic_rotate %24 by %c1_i32 dim 1 : vector<2x256xf32>, i32 -> vector<2x256xf32>
    %26 = vector.extract_strided_slice %2 {offsets = [3, 0], sizes = [1, 256], strides = [1, 1]} : vector<9x256xf32> to vector<1x256xf32>
    %27 = vector.broadcast %26 : vector<1x256xf32> to vector<2x256xf32>
    %28 = arith.mulf %25, %27 : vector<2x256xf32>
    %29 = arith.addf %23, %28 : vector<2x256xf32>
    %30 = vector.extract_strided_slice %4 {offsets = [10, 0], sizes = [2, 256], strides = [1, 1]} : vector<18x256xf32> to vector<2x256xf32>
    %c255_i32 = arith.constant 255 : i32
    %31 = tpu.dynamic_rotate %30 by %c255_i32 dim 1 : vector<2x256xf32>, i32 -> vector<2x256xf32>
    %32 = vector.extract_strided_slice %2 {offsets = [5, 0], sizes = [1, 256], strides = [1, 1]} : vector<9x256xf32> to vector<1x256xf32>
    %33 = vector.broadcast %32 : vector<1x256xf32> to vector<2x256xf32>
    %34 = arith.mulf %31, %33 : vector<2x256xf32>
    %35 = arith.addf %29, %34 : vector<2x256xf32>
    %36 = vector.extract_strided_slice %4 {offsets = [12, 0], sizes = [2, 256], strides = [1, 1]} : vector<18x256xf32> to vector<2x256xf32>
    %c241_i32 = arith.constant 241 : i32
    %37 = tpu.dynamic_rotate %36 by %c241_i32 dim 1 : vector<2x256xf32>, i32 -> vector<2x256xf32>
    %38 = vector.extract_strided_slice %2 {offsets = [6, 0], sizes = [1, 256], strides = [1, 1]} : vector<9x256xf32> to vector<1x256xf32>
    %39 = vector.broadcast %38 : vector<1x256xf32> to vector<2x256xf32>
    %40 = arith.mulf %37, %39 : vector<2x256xf32>
    %41 = arith.addf %35, %40 : vector<2x256xf32>
    %42 = vector.extract_strided_slice %4 {offsets = [14, 0], sizes = [2, 256], strides = [1, 1]} : vector<18x256xf32> to vector<2x256xf32>
    %c240_i32 = arith.constant 240 : i32
    %43 = tpu.dynamic_rotate %42 by %c240_i32 dim 1 : vector<2x256xf32>, i32 -> vector<2x256xf32>
    %44 = vector.extract_strided_slice %2 {offsets = [7, 0], sizes = [1, 256], strides = [1, 1]} : vector<9x256xf32> to vector<1x256xf32>
    %45 = vector.broadcast %44 : vector<1x256xf32> to vector<2x256xf32>
    %46 = arith.mulf %43, %45 : vector<2x256xf32>
    %47 = arith.addf %41, %46 : vector<2x256xf32>
    %48 = vector.extract_strided_slice %4 {offsets = [16, 0], sizes = [2, 256], strides = [1, 1]} : vector<18x256xf32> to vector<2x256xf32>
    %c239_i32 = arith.constant 239 : i32
    %49 = tpu.dynamic_rotate %48 by %c239_i32 dim 1 : vector<2x256xf32>, i32 -> vector<2x256xf32>
    %50 = vector.extract_strided_slice %2 {offsets = [8, 0], sizes = [1, 256], strides = [1, 1]} : vector<9x256xf32> to vector<1x256xf32>
    %51 = vector.broadcast %50 : vector<1x256xf32> to vector<2x256xf32>
    %52 = arith.mulf %49, %51 : vector<2x256xf32>
    %53 = arith.addf %47, %52 : vector<2x256xf32>
    %c0_6 = arith.constant 0 : index
    %c0_7 = arith.constant 0 : index
    %54 = vector.load %arg4[%c0_6, %c0_7] : memref<2x1xf32, #tpu.memory_space<vmem>>, vector<2x1xf32>
    %55 = vector.broadcast %54 : vector<2x1xf32> to vector<2x256xf32>
    %56 = arith.addf %53, %55 : vector<2x256xf32>
    %cst_8 = arith.constant 0.000000e+00 : f32
    %57 = vector.broadcast %cst_8 : f32 to vector<2x256xf32>
    %58 = arith.maximumf %56, %57 : vector<2x256xf32>
    %c0_9 = arith.constant 0 : index
    %c0_10 = arith.constant 0 : index
    %59 = vector.load %arg5[%c0_9, %c0_10] : memref<9x2xf32, #tpu.memory_space<vmem>>, vector<9x2xf32>
    %cst_11 = arith.constant dense<0.000000e+00> : vector<9x256xf32>
    %60 = tpu.matmul %59, %58, %cst_11 {dimension_numbers = #tpu.dot_dimension_numbers<[1], [0], [0], [1], [0, 0, 1, 1], [], []>} : vector<9x2xf32>, vector<2x256xf32>, vector<9x256xf32> -> vector<9x256xf32>
    %61 = vector.extract_strided_slice %60 {offsets = [4, 0], sizes = [1, 256], strides = [1, 1]} : vector<9x256xf32> to vector<1x256xf32>
    %62 = vector.extract_strided_slice %60 {offsets = [0, 0], sizes = [1, 256], strides = [1, 1]} : vector<9x256xf32> to vector<1x256xf32>
    %c17_i32_12 = arith.constant 17 : i32
    %63 = tpu.dynamic_rotate %62 by %c17_i32_12 dim 1 : vector<1x256xf32>, i32 -> vector<1x256xf32>
    %64 = vector.extract_strided_slice %2 {offsets = [0, 0], sizes = [1, 256], strides = [1, 1]} : vector<9x256xf32> to vector<1x256xf32>
    %65 = arith.mulf %63, %64 : vector<1x256xf32>
    %66 = arith.addf %61, %65 : vector<1x256xf32>
    %67 = vector.extract_strided_slice %60 {offsets = [1, 0], sizes = [1, 256], strides = [1, 1]} : vector<9x256xf32> to vector<1x256xf32>
    %c16_i32_13 = arith.constant 16 : i32
    %68 = tpu.dynamic_rotate %67 by %c16_i32_13 dim 1 : vector<1x256xf32>, i32 -> vector<1x256xf32>
    %69 = vector.extract_strided_slice %2 {offsets = [1, 0], sizes = [1, 256], strides = [1, 1]} : vector<9x256xf32> to vector<1x256xf32>
    %70 = arith.mulf %68, %69 : vector<1x256xf32>
    %71 = arith.addf %66, %70 : vector<1x256xf32>
    %72 = vector.extract_strided_slice %60 {offsets = [2, 0], sizes = [1, 256], strides = [1, 1]} : vector<9x256xf32> to vector<1x256xf32>
    %c15_i32_14 = arith.constant 15 : i32
    %73 = tpu.dynamic_rotate %72 by %c15_i32_14 dim 1 : vector<1x256xf32>, i32 -> vector<1x256xf32>
    %74 = vector.extract_strided_slice %2 {offsets = [2, 0], sizes = [1, 256], strides = [1, 1]} : vector<9x256xf32> to vector<1x256xf32>
    %75 = arith.mulf %73, %74 : vector<1x256xf32>
    %76 = arith.addf %71, %75 : vector<1x256xf32>
    %77 = vector.extract_strided_slice %60 {offsets = [3, 0], sizes = [1, 256], strides = [1, 1]} : vector<9x256xf32> to vector<1x256xf32>
    %c1_i32_15 = arith.constant 1 : i32
    %78 = tpu.dynamic_rotate %77 by %c1_i32_15 dim 1 : vector<1x256xf32>, i32 -> vector<1x256xf32>
    %79 = vector.extract_strided_slice %2 {offsets = [3, 0], sizes = [1, 256], strides = [1, 1]} : vector<9x256xf32> to vector<1x256xf32>
    %80 = arith.mulf %78, %79 : vector<1x256xf32>
    %81 = arith.addf %76, %80 : vector<1x256xf32>
    %82 = vector.extract_strided_slice %60 {offsets = [5, 0], sizes = [1, 256], strides = [1, 1]} : vector<9x256xf32> to vector<1x256xf32>
    %c255_i32_16 = arith.constant 255 : i32
    %83 = tpu.dynamic_rotate %82 by %c255_i32_16 dim 1 : vector<1x256xf32>, i32 -> vector<1x256xf32>
    %84 = vector.extract_strided_slice %2 {offsets = [5, 0], sizes = [1, 256], strides = [1, 1]} : vector<9x256xf32> to vector<1x256xf32>
    %85 = arith.mulf %83, %84 : vector<1x256xf32>
    %86 = arith.addf %81, %85 : vector<1x256xf32>
    %87 = vector.extract_strided_slice %60 {offsets = [6, 0], sizes = [1, 256], strides = [1, 1]} : vector<9x256xf32> to vector<1x256xf32>
    %c241_i32_17 = arith.constant 241 : i32
    %88 = tpu.dynamic_rotate %87 by %c241_i32_17 dim 1 : vector<1x256xf32>, i32 -> vector<1x256xf32>
    %89 = vector.extract_strided_slice %2 {offsets = [6, 0], sizes = [1, 256], strides = [1, 1]} : vector<9x256xf32> to vector<1x256xf32>
    %90 = arith.mulf %88, %89 : vector<1x256xf32>
    %91 = arith.addf %86, %90 : vector<1x256xf32>
    %92 = vector.extract_strided_slice %60 {offsets = [7, 0], sizes = [1, 256], strides = [1, 1]} : vector<9x256xf32> to vector<1x256xf32>
    %c240_i32_18 = arith.constant 240 : i32
    %93 = tpu.dynamic_rotate %92 by %c240_i32_18 dim 1 : vector<1x256xf32>, i32 -> vector<1x256xf32>
    %94 = vector.extract_strided_slice %2 {offsets = [7, 0], sizes = [1, 256], strides = [1, 1]} : vector<9x256xf32> to vector<1x256xf32>
    %95 = arith.mulf %93, %94 : vector<1x256xf32>
    %96 = arith.addf %91, %95 : vector<1x256xf32>
    %97 = vector.extract_strided_slice %60 {offsets = [8, 0], sizes = [1, 256], strides = [1, 1]} : vector<9x256xf32> to vector<1x256xf32>
    %c239_i32_19 = arith.constant 239 : i32
    %98 = tpu.dynamic_rotate %97 by %c239_i32_19 dim 1 : vector<1x256xf32>, i32 -> vector<1x256xf32>
    %99 = vector.extract_strided_slice %2 {offsets = [8, 0], sizes = [1, 256], strides = [1, 1]} : vector<9x256xf32> to vector<1x256xf32>
    %100 = arith.mulf %98, %99 : vector<1x256xf32>
    %101 = arith.addf %96, %100 : vector<1x256xf32>
    %c0_20 = arith.constant 0 : index
    %102 = memref.load %arg6[%c0_20] : memref<1xf32, #tpu.memory_space<smem>>
    %103 = vector.broadcast %102 : f32 to vector<1x256xf32>
    %104 = arith.addf %101, %103 : vector<1x256xf32>
    %105 = arith.negf %104 : vector<1x256xf32>
    %106 = math.exp %105 : vector<1x256xf32>
    %cst_21 = arith.constant 1.000000e+00 : f32
    %107 = vector.broadcast %cst_21 : f32 to vector<1x256xf32>
    %108 = arith.addf %107, %106 : vector<1x256xf32>
    %109 = arith.divf %107, %108 : vector<1x256xf32>
    %110 = vector.broadcast %109 : vector<1x256xf32> to vector<16x256xf32>
    %111 = arith.mulf %1, %110 : vector<16x256xf32>
    %c0_22 = arith.constant 0 : index
    %c0_23 = arith.constant 0 : index
    %c0_24 = arith.constant 0 : index
    %112 = vector.load %arg7[%c0_22, %c0_23, %c0_24] : memref<1x16x256xf32, #tpu.memory_space<vmem>>, vector<1x16x256xf32>
    %113 = vector.shape_cast %112 : vector<1x16x256xf32> to vector<16x256xf32>
    %114 = vector.shape_cast %111 : vector<16x256xf32> to vector<1x16x256xf32>
    tpu.vector_store %arg7[%c0_22, %c0_23, %c0_24], %114 {strides = array<i32>} : memref<1x16x256xf32, #tpu.memory_space<vmem>>, vector<1x16x256xf32>,
    return
  }
  func.func @transform_0(%arg0: i32) -> (i32, i32, i32) {
    %c0_i32 = arith.constant 0 : i32
    %c0_i32_0 = arith.constant 0 : i32
    %c0_i32_1 = arith.constant 0 : i32
    return %arg0, %c0_i32, %c0_i32_0 : i32, i32, i32
  }
  func.func @transform_1(%arg0: i32) -> (i32, i32) {
    %c0_i32 = arith.constant 0 : i32
    %c0_i32_0 = arith.constant 0 : i32
    %c0_i32_1 = arith.constant 0 : i32
    return %c0_i32, %c0_i32_0 : i32, i32
  }
  func.func @transform_2(%arg0: i32) -> (i32, i32) {
    %c0_i32 = arith.constant 0 : i32
    %c0_i32_0 = arith.constant 0 : i32
    %c0_i32_1 = arith.constant 0 : i32
    return %c0_i32, %c0_i32_0 : i32, i32
  }
  func.func @transform_3(%arg0: i32) -> (i32, i32) {
    %c0_i32 = arith.constant 0 : i32
    %c0_i32_0 = arith.constant 0 : i32
    %c0_i32_1 = arith.constant 0 : i32
    return %c0_i32, %c0_i32_0 : i32, i32
  }
  func.func @transform_4(%arg0: i32) -> (i32, i32) {
    %c0_i32 = arith.constant 0 : i32
    %c0_i32_0 = arith.constant 0 : i32
    %c0_i32_1 = arith.constant 0 : i32
    return %c0_i32, %c0_i32_0 : i32, i32
  }
  func.func @transform_5(%arg0: i32) -> i32 {
    %c0_i32 = arith.constant 0 : i32
    %c0_i32_0 = arith.constant 0 : i32
    return %c0_i32 : i32
  }
  func.func @transform_6(%arg0: i32) -> (i32, i32, i32) {
    %c0_i32 = arith.constant 0 : i32
    %c0_i32_0 = arith.constant 0 : i32
    %c0_i32_1 = arith.constant 0 : i32
    return %arg0, %c0_i32, %c0_i32_0 : i32, i32, i32
  }
}

</mosaic_0001>

<llo_original>
// kernel: pa_layer.1
$region0: #{pa_layer.1}
  #allocation0 [shape = 'u32[]', space=smem, size = 0x4, offset = 0x4, fixed_abs, tag = 'smem constant byte address 0x4 - core index']
  #allocation1 [shape = 'u32[144,128]{1,0:T(1,128)}', space=vmem, size = 0x12000, scoped, tag = 'internal scratch']
  #allocation2 [shape = 'f32[1]{0:T(128)S(6)}', space=smem, size = 0x200, scoped, tag = 'scoped memory for pa_layer.1']
  %s0 = inlined_call_operand.vmem [shape: f32[2,16,256], index: 0, kind: input, shape index: {}]
  %s1 = inlined_call_operand.vmem [shape: f32[9,256], index: 1, kind: input, shape index: {}]
  %s2 = inlined_call_operand.vmem [shape: f32[18,16], index: 2, kind: input, shape index: {}]
  %s3 = inlined_call_operand.vmem [shape: f32[2,1], index: 3, kind: input, shape index: {}]
  %s4 = inlined_call_operand.vmem [shape: f32[9,2], index: 4, kind: input, shape index: {}]
  %s5 = inlined_call_operand.<no memory space> [shape: f32[1], index: 5, kind: input, shape index: {}]
  %s6 = inlined_call_operand.vmem [shape: f32[2,16,256], index: 6, kind: output, shape index: {}]
  %s7 = sld [smem:[#allocation0]]
  $region57: #{pa_layer.1} parent=0
    _
  %s9 = ssub.s32 1, %s7
  %s10 = scalar_select 0, %s9, %s7
  %11 = sst [smem:[#allocation2]] %s5
  loop: start=0, step=1, limit=4
  $region2: #{pa_layer.1} parent=0 // loop_pre_header
    _
  $region3: #{pa_layer.1} parent=0 // loop_header
    %s13 = sphi 0, %s17
    %p14 = scmp.ge.s32.totalorder %s13, 4
    %s23 = sphi 0, %s25
    %s26 = sphi 0, %s23
    %s27 = sphi 0, %s26
    %s43 = sphi 0, %s27
    %s47 = sphi 0, %s47
    %s49 = sphi 0, %s47
    %s50 = sphi 0, %s49
    %s64 = sphi 0, %s50
    %s68 = sphi 0, %s68
    %s70 = sphi 0, %s68
    %s71 = sphi 0, %s70
    %s85 = sphi 0, %s71
    %s89 = sphi 0, %s89
    %s91 = sphi 0, %s89
    %s92 = sphi 0, %s91
    %s106 = sphi 0, %s92
    %s110 = sphi 0, %s110
    %s112 = sphi 0, %s110
    %s113 = sphi 0, %s112
    %s127 = sphi 0, %s113
    %s131 = sphi 0, %s131
    %s133 = sphi 0, %s131
    %s134 = sphi 0, %s133
    %s148 = sphi 0, %s134
    %s154 = sphi 0, %s156
    %s157 = sphi 0, %s154
    %s158 = sphi 0, %s157
    %s174 = sphi 0, %s158
  $region4: #{pa_layer.1} parent=0 // loop_header_branch
    %16 = sbr.rel (%p14) target = $region8
  $region5: #{pa_layer.1} parent=0 // loop_body
    %s18 = ssub.s32 %s13, 1
    %s19 = ssub.s32 %s13, 2
    %s20 = sadd.s32 %s13, 1
    %s21 = ssub.s32 %s13, %s20
    %p22 = scmp.eq.s32.totalorder %s21, 0
    %s24 = sadd.s32 %s23, 1
    %s25 = scalar_select %p22, %s23, %s24
    %p28 = pneg %p22
    %p29 = scmp.eq.s32.totalorder %s13, 1
    %p30 = por %p28, %p29
    %p31 = scmp.ne.s32.totalorder %s23, %s26
    %p32 = scmp.eq.s32.totalorder %s13, 0
    %p33 = por %p31, %p32
    %p34 = scmp.ne.s32.totalorder %s23, %s26
    %p35 = scmp.eq.s32.totalorder %s18, 1
    %p36 = por %p34, %p35
    %p37 = scmp.ne.s32.totalorder %s26, %s27
    %p38 = scmp.eq.s32.totalorder %s18, 0
    %p39 = por %p37, %p38
    %p40 = scmp.ne.s32.totalorder %s26, %s27
    %p41 = scmp.eq.s32.totalorder %s19, 1
    %p42 = por %p40, %p41
    %p44 = scmp.ne.s32.totalorder %s27, %s43
    %p45 = scmp.eq.s32.totalorder %s19, 0
    %p46 = por %p44, %p45
    %s48 = sadd.s32 %s47, 1
    %p51 = scmp.eq.s32.totalorder %s13, 1
    %p52 = scmp.ne.s32.totalorder %s47, %s49
    %p53 = scmp.eq.s32.totalorder %s13, 0
    %p54 = por %p52, %p53
    %p55 = scmp.ne.s32.totalorder %s47, %s49
    %p56 = scmp.eq.s32.totalorder %s18, 1
    %p57 = por %p55, %p56
    %p58 = scmp.ne.s32.totalorder %s49, %s50
    %p59 = scmp.eq.s32.totalorder %s18, 0
    %p60 = por %p58, %p59
    %p61 = scmp.ne.s32.totalorder %s49, %s50
    %p62 = scmp.eq.s32.totalorder %s19, 1
    %p63 = por %p61, %p62
    %p65 = scmp.ne.s32.totalorder %s50, %s64
    %p66 = scmp.eq.s32.totalorder %s19, 0
    %p67 = por %p65, %p66
    %s69 = sadd.s32 %s68, 1
    %p72 = scmp.eq.s32.totalorder %s13, 1
    %p73 = scmp.ne.s32.totalorder %s68, %s70
    %p74 = scmp.eq.s32.totalorder %s13, 0
    %p75 = por %p73, %p74
    %p76 = scmp.ne.s32.totalorder %s68, %s70
    %p77 = scmp.eq.s32.totalorder %s18, 1
    %p78 = por %p76, %p77
    %p79 = scmp.ne.s32.totalorder %s70, %s71
    %p80 = scmp.eq.s32.totalorder %s18, 0
    %p81 = por %p79, %p80
    %p82 = scmp.ne.s32.totalorder %s70, %s71
    %p83 = scmp.eq.s32.totalorder %s19, 1
    %p84 = por %p82, %p83
    %p86 = scmp.ne.s32.totalorder %s71, %s85
    %p87 = scmp.eq.s32.totalorder %s19, 0
    %p88 = por %p86, %p87
    %s90 = sadd.s32 %s89, 1
    %p93 = scmp.eq.s32.totalorder %s13, 1
    %p94 = scmp.ne.s32.totalorder %s89, %s91
    %p95 = scmp.eq.s32.totalorder %s13, 0
    %p96 = por %p94, %p95
    %p97 = scmp.ne.s32.totalorder %s89, %s91
    %p98 = scmp.eq.s32.totalorder %s18, 1
    %p99 = por %p97, %p98
    %p100 = scmp.ne.s32.totalorder %s91, %s92
    %p101 = scmp.eq.s32.totalorder %s18, 0
    %p102 = por %p100, %p101
    %p103 = scmp.ne.s32.totalorder %s91, %s92
    %p104 = scmp.eq.s32.totalorder %s19, 1
    %p105 = por %p103, %p104
    %p107 = scmp.ne.s32.totalorder %s92, %s106
    %p108 = scmp.eq.s32.totalorder %s19, 0
    %p109 = por %p107, %p108
    %s111 = sadd.s32 %s110, 1
    %p114 = scmp.eq.s32.totalorder %s13, 1
    %p115 = scmp.ne.s32.totalorder %s110, %s112
    %p116 = scmp.eq.s32.totalorder %s13, 0
    %p117 = por %p115, %p116
    %p118 = scmp.ne.s32.totalorder %s110, %s112
    %p119 = scmp.eq.s32.totalorder %s18, 1
    %p120 = por %p118, %p119
    %p121 = scmp.ne.s32.totalorder %s112, %s113
    %p122 = scmp.eq.s32.totalorder %s18, 0
    %p123 = por %p121, %p122
    %p124 = scmp.ne.s32.totalorder %s112, %s113
    %p125 = scmp.eq.s32.totalorder %s19, 1
    %p126 = por %p124, %p125
    %p128 = scmp.ne.s32.totalorder %s113, %s127
    %p129 = scmp.eq.s32.totalorder %s19, 0
    %p130 = por %p128, %p129
    %s132 = sadd.s32 %s131, 1
    %p135 = scmp.eq.s32.totalorder %s13, 1
    %p136 = scmp.ne.s32.totalorder %s131, %s133
    %p137 = scmp.eq.s32.totalorder %s13, 0
    %p138 = por %p136, %p137
    %p139 = scmp.ne.s32.totalorder %s131, %s133
    %p140 = scmp.eq.s32.totalorder %s18, 1
    %p141 = por %p139, %p140
    %p142 = scmp.ne.s32.totalorder %s133, %s134
    %p143 = scmp.eq.s32.totalorder %s18, 0
    %p144 = por %p142, %p143
    %p145 = scmp.ne.s32.totalorder %s133, %s134
    %p146 = scmp.eq.s32.totalorder %s19, 1
    %p147 = por %p145, %p146
    %p149 = scmp.ne.s32.totalorder %s134, %s148
    %p150 = scmp.eq.s32.totalorder %s19, 0
    %p151 = por %p149, %p150
    %s152 = ssub.s32 %s13, %s20
    %p153 = scmp.eq.s32.totalorder %s152, 0
    %s155 = sadd.s32 %s154, 1
    %s156 = scalar_select %p153, %s154, %s155
    %p159 = pneg %p153
    %p160 = scmp.eq.s32.totalorder %s13, 1
    %p161 = por %p159, %p160
    %p162 = scmp.ne.s32.totalorder %s154, %s157
    %p163 = scmp.eq.s32.totalorder %s13, 0
    %p164 = por %p162, %p163
    %p165 = scmp.ne.s32.totalorder %s154, %s157
    %p166 = scmp.eq.s32.totalorder %s18, 1
    %p167 = por %p165, %p166
    %p168 = scmp.ne.s32.totalorder %s157, %s158
    %p169 = scmp.eq.s32.totalorder %s18, 0
    %p170 = por %p168, %p169
    %p171 = scmp.ne.s32.totalorder %s157, %s158
    %p172 = scmp.eq.s32.totalorder %s19, 1
    %p173 = por %p171, %p172
    %p175 = scmp.ne.s32.totalorder %s158, %s174
    %p176 = scmp.eq.s32.totalorder %s19, 0
    %p177 = por %p175, %p176
    %p178 = scmp.le.s32.totalorder 1, %s13
    %p179 = scmp.lt.s32.totalorder %s13, 3
    %p180 = pnand %p178, %p179
    %p181 = pneg %p180
    // Predicated region
    $region9: #{pa_layer.1} parent=5 // pred_check
      _
    $region10: #{pa_layer.1} parent=5 // pred_check_branch
      %183 = sbr.rel (%p180) target = $region12
    $region11: #{pa_layer.1} parent=5 // pred_region
      %s184 = ssub.s32 %s13, 1
      // Predicated region
      $region13: #{pa_layer.1} parent=11 // pred_check
        %p185 = pneg %p60
      $region14: #{pa_layer.1} parent=11 // pred_check_branch
        %187 = sbr.rel (%p185) target = $region16
      $region15: #{pa_layer.1} parent=11 // pred_region
        _
      $region16: #{pa_layer.1} parent=11 // pred_fallthru
        _
      // Predicated region
      $region17: #{pa_layer.1} parent=11 // pred_check
        %p188 = pneg %p81
      $region18: #{pa_layer.1} parent=11 // pred_check_branch
        %190 = sbr.rel (%p188) target = $region20
      $region19: #{pa_layer.1} parent=11 // pred_region
        _
      $region20: #{pa_layer.1} parent=11 // pred_fallthru
        _
      // Predicated region
      $region21: #{pa_layer.1} parent=11 // pred_check
        %p191 = pneg %p102
      $region22: #{pa_layer.1} parent=11 // pred_check_branch
        %193 = sbr.rel (%p191) target = $region24
      $region23: #{pa_layer.1} parent=11 // pred_region
        _
      $region24: #{pa_layer.1} parent=11 // pred_fallthru
        _
      // Predicated region
      $region25: #{pa_layer.1} parent=11 // pred_check
        %p194 = pneg %p123
      $region26: #{pa_layer.1} parent=11 // pred_check_branch
        %196 = sbr.rel (%p194) target = $region28
      $region27: #{pa_layer.1} parent=11 // pred_region
        _
      $region28: #{pa_layer.1} parent=11 // pred_fallthru
        _
      // Predicated region
      $region29: #{pa_layer.1} parent=11 // pred_check
        %p197 = pneg %p144
      $region30: #{pa_layer.1} parent=11 // pred_check_branch
        %199 = sbr.rel (%p197) target = $region32
      $region31: #{pa_layer.1} parent=11 // pred_region
        _
      $region32: #{pa_layer.1} parent=11 // pred_fallthru
        _
    $region12: #{pa_layer.1} parent=5 // pred_fallthru
      _
    %p200 = scmp.lt.s32.totalorder %s13, 2
    // Predicated region
    $region33: #{pa_layer.1} parent=5 // pred_check
      %p201 = pneg %p200
    $region34: #{pa_layer.1} parent=5 // pred_check_branch
      %203 = sbr.rel (%p201) target = $region36
    $region35: #{pa_layer.1} parent=5 // pred_region
      // Predicated region
      $region37: #{pa_layer.1} parent=35 // pred_check
        %p204 = pneg %p33
      $region38: #{pa_layer.1} parent=35 // pred_check_branch
        %206 = sbr.rel (%p204) target = $region40
      $region39: #{pa_layer.1} parent=35 // pred_region
        %p207 = scmp.lt.s32.totalorder %s13, 1
        %s208 = scalar_select %p207, %s13, 1
        %s209 = smul.addr %s208, 4
        %s210 = smul.addr %s209, 8
        %s211 = scalar_lea.vmem %s0, %s210
      $region40: #{pa_layer.1} parent=35 // pred_fallthru
        _
    $region36: #{pa_layer.1} parent=5 // pred_fallthru
      _
    %p212 = scmp.le.s32.totalorder 1, %s13
    %p213 = scmp.lt.s32.totalorder %s13, 3
    %p214 = pnand %p212, %p213
    %p215 = pneg %p214
    // Predicated region
    $region41: #{pa_layer.1} parent=5 // pred_check
      _
    $region42: #{pa_layer.1} parent=5 // pred_check_branch
      %217 = sbr.rel (%p214) target = $region44
    $region43: #{pa_layer.1} parent=5 // pred_region
      %s218 = ssub.s32 %s13, 1
      %p219 = scmp.lt.s32.totalorder %s18, 1
      %s220 = scalar_select %p219, %s18, 1
      %s221 = smul.addr %s220, 4
      %s222 = smul.addr %s221, 8
      %s223 = scalar_lea.vmem %s0, %s222
      %p224 = pneg %p39
      %p225 = pneg %p36
      %p226 = pneg %p60
      %p227 = pneg %p57
      %p228 = pneg %p81
      %p229 = pneg %p78
      %p230 = pneg %p102
      %p231 = pneg %p99
      %p232 = pneg %p123
      %p233 = pneg %p120
      %p234 = pneg %p144
      %p235 = pneg %p141
      %p236 = pneg %p170
      %p237 = pneg %p167
      %p238 = scmp.lt.s32.totalorder %s18, 1
      %s239 = scalar_select %p238, %s18, 1
      %s240 = smul.addr %s239, 4
      %s241 = smul.addr %s240, 8
      %s242 = scalar_lea.vmem %s6, %s241
      %p243 = scmp.lt.s32.totalorder %s18, 1
      %s244 = scalar_select %p243, %s18, 1
      %s245 = smul.addr %s244, 4
      %s246 = smul.addr %s245, 8
      %s247 = scalar_lea.vmem %s0, %s246
      %p248 = scmp.lt.s32.totalorder %s18, 1
      %s249 = scalar_select %p248, %s18, 1
      %s250 = smul.addr %s249, 4
      %s251 = smul.addr %s250, 8
      %s252 = scalar_lea.vmem %s6, %s251
      %v253 = vld [vmem:[%s247] sm:$0xff]
      %v254 = vld [vmem:[%s247 + $0x8] sm:$0xff]
      %v255 = vld [vmem:[%s247 + $0x10] sm:$0xff]
      %v256 = vld [vmem:[%s247 + $0x18] sm:$0xff]
      %v257 = vld [vmem:[%s1] sm:$0xff]
      %v258 = vld [vmem:[%s1 + $0x8] sm:$0xff]
      %v259 = vld [vmem:[%s1 + $0x10] sm:$0x1]
      %v260 = vld [vmem:[%s1 + $0x18] sm:$0x1]
      %v261 = vld [vmem:[%s2] sm:$0xff]
      %v262 = vld [vmem:[%s2 + $0x8] sm:$0xff]
      %v263 = vld [vmem:[%s2 + $0x10] sm:$0x3]
      %vm264 = vcmask 130048
      %v266 = vsel %vm264, %v261, 0
      %v269 = vsel %vm264, %v262, 0
      %v272 = vsel %vm264, %v263, 0
      %274 = vmatprep.subr.mxu0 %v254
      %275 = vmatpush1.msra.mxu0 %v253
      %276 = vmatprep.subr.mxu0 %v256
      %277 = vmatpush1.msra.mxu0 %v255
      %278 = vmatprep.subr.mxu0 0.0
      %279 = vmatpush1.msra.mxu0 0.0
      %280 = vmatprep.subr.mxu0 0.0
      %281 = vmatpush1.msra.mxu0 0.0
      %282 = vmatprep.subr.mxu0 0.0
      %283 = vmatpush1.msra.mxu0 0.0
      %284 = vmatprep.subr.mxu0 0.0
      %285 = vmatpush1.msra.mxu0 0.0
      %286 = vmatprep.subr.mxu0 0.0
      %287 = vmatpush1.msra.mxu0 0.0
      %288 = vmatprep.subr.mxu0 0.0
      %289 = vmatpush1.msra.mxu0 0.0
      %290 = vmatprep.subr.mxu0 0.0
      %291 = vmatpush1.msra.mxu0 0.0
      %292 = vmatprep.subr.mxu0 0.0
      %293 = vmatpush1.msra.mxu0 0.0
      %294 = vmatprep.subr.mxu0 0.0
      %295 = vmatpush1.msra.mxu0 0.0
      %296 = vmatprep.subr.mxu0 0.0
      %297 = vmatpush1.msra.mxu0 0.0
      %298 = vmatprep.subr.mxu0 0.0
      %299 = vmatpush1.msra.mxu0 0.0
      %300 = vmatprep.subr.mxu0 0.0
      %301 = vmatpush1.msra.mxu0 0.0
      %302 = vmatprep.subr.mxu0 0.0
      %303 = vmatpush1.msra.mxu0 0.0
      %304 = vmatprep.subr.mxu0 0.0
      %305 = vmatpush1.msra.mxu0 0.0
      %306 = vmatprep.subr.mxu0 0.0
      %307 = vmatpush1.msra.mxu0 0.0
      %308 = vmatprep.subr.mxu0 0.0
      %309 = vmatpush1.msra.mxu0 0.0
      %310 = vmatprep.subr.mxu0 0.0
      %311 = vmatpush1.msra.mxu0 0.0
      %312 = vmatprep.subr.mxu0 0.0
      %313 = vmatpush1.msra.mxu0 0.0
      %314 = vmatprep.subr.mxu0 0.0
      %315 = vmatpush1.msra.mxu0 0.0
      %316 = vmatprep.subr.mxu0 0.0
      %317 = vmatpush1.msra.mxu0 0.0
      %318 = vmatprep.subr.mxu0 0.0
      %319 = vmatpush1.msra.mxu0 0.0
      %320 = vmatprep.subr.mxu0 0.0
      %321 = vmatpush1.msra.mxu0 0.0
      %322 = vmatprep.subr.mxu0 0.0
      %323 = vmatpush1.msra.mxu0 0.0
      %324 = vmatprep.subr.mxu0 0.0
      %325 = vmatpush1.msra.mxu0 0.0
      %326 = vmatprep.subr.mxu0 0.0
      %327 = vmatpush1.msra.mxu0 0.0
      %328 = vmatprep.subr.mxu0 0.0
      %329 = vmatpush1.msra.mxu0 0.0
      %330 = vmatprep.subr.mxu0 0.0
      %331 = vmatpush1.msra.mxu0 0.0
      %332 = vmatprep.subr.mxu0 0.0
      %333 = vmatpush1.msra.mxu0 0.0
      %334 = vmatprep.subr.mxu0 0.0
      %335 = vmatpush1.msra.mxu0 0.0
      %336 = vmatprep.subr.mxu0 0.0
      %337 = vmatpush1.msra.mxu0 0.0
      %338 = vmatprep.mubr.f32.mxu0 0.0
      %339 = vmatmul.mubr.f32.gmra.mrb[0].mxu0 %v266
      %v340 = vpop.f32.mrb[0].mxu0
      %v341 = vadd.f32 0.0, %v340
      %v342 = vpop.f32.mrb[0].mxu0
      %v343 = vadd.f32 0.0, %v342
      %344 = vmatprep.mubr.f32.mxu0 0.0
      %345 = vmatmul.mubr.f32.gmra.mrb[0].mxu0 %v269
      %v346 = vpop.f32.mrb[0].mxu0
      %v347 = vadd.f32 0.0, %v346
      %v348 = vpop.f32.mrb[0].mxu0
      %v349 = vadd.f32 0.0, %v348
      %350 = vmatprep.mubr.f32.mxu0 0.0
      %351 = vmatmul.mubr.f32.gmra.mrb[0].mxu0 %v272
      %v352 = vpop.f32.mrb[0].mxu0
      %v353 = vadd.f32 0.0, %v352
      %v354 = vpop.f32.mrb[0].mxu0
      %v355 = vadd.f32 0.0, %v354
      %356 = vdwg.mxu0
      %357 = vrot.lane.b32.xlu0 %v341, 17
      %v358 = vpop.permute.xlu0 %357
      %359 = vrot.lane.b32.xlu0 %v343, 17
      %v360 = vpop.permute.xlu0 %359
      %v361 = vlaneseq
      %v362 = vand.u32 %v361, 127
      %vm363 = vcmp.lt.s32.totalorder %v362, 17
      %v364 = vsel %vm363, %v358, %v360
      %v365 = vsel %vm363, %v360, %v358
      %v366 = vlaneseq
      %v367 = vshrl.u32 %v366, 7
      %v368 = vsub.s32 0, %v367
      %v369 = vrot.slane %v257, %v368
      %v370 = vlaneseq
      %v371 = vshrl.u32 %v370, 7
      %v372 = vsub.s32 0, %v371
      %v373 = vrot.slane %v258, %v372
      %v374 = vmul.f32 %v365, %v369
      %v375 = vmul.f32 %v364, %v373
      %v376 = vadd.f32 %v347, %v374
      %v377 = vadd.f32 %v349, %v375
      %v380 = vrot.slane %v341, 2
      %v381 = vrot.slane %v343, 2
      %384 = vrot.lane.b32.xlu0 %v380, 16
      %v385 = vpop.permute.xlu0 %384
      %386 = vrot.lane.b32.xlu0 %v381, 16
      %v387 = vpop.permute.xlu0 %386
      %vm388 = vcmp.lt.s32.totalorder %v362, 16
      %v389 = vsel %vm388, %v385, %v387
      %v390 = vsel %vm388, %v387, %v385
      %v391 = vlaneseq
      %v392 = vshrl.u32 %v391, 7
      %v393 = vsub.s32 1, %v392
      %v394 = vrot.slane %v257, %v393
      %v395 = vlaneseq
      %v396 = vshrl.u32 %v395, 7
      %v397 = vsub.s32 1, %v396
      %v398 = vrot.slane %v258, %v397
      %v399 = vmul.f32 %v390, %v394
      %v400 = vmul.f32 %v389, %v398
      %v401 = vadd.f32 %v376, %v399
      %v402 = vadd.f32 %v377, %v400
      %v403 = vrot.slane %v341, 4
      %v404 = vrot.slane %v343, 4
      %407 = vrot.lane.b32.xlu0 %v403, 15
      %v408 = vpop.permute.xlu0 %407
      %409 = vrot.lane.b32.xlu0 %v404, 15
      %v410 = vpop.permute.xlu0 %409
      %vm411 = vcmp.lt.s32.totalorder %v362, 15
      %v412 = vsel %vm411, %v408, %v410
      %v413 = vsel %vm411, %v410, %v408
      %v414 = vlaneseq
      %v415 = vshrl.u32 %v414, 7
      %v416 = vsub.s32 2, %v415
      %v417 = vrot.slane %v257, %v416
      %v418 = vlaneseq
      %v419 = vshrl.u32 %v418, 7
      %v420 = vsub.s32 2, %v419
      %v421 = vrot.slane %v258, %v420
      %v422 = vmul.f32 %v413, %v417
      %v423 = vmul.f32 %v412, %v421
      %v424 = vadd.f32 %v401, %v422
      %v425 = vadd.f32 %v402, %v423
      %v426 = vrot.slane %v341, 6
      %v427 = vrot.slane %v343, 6
      %430 = vrot.lane.b32.xlu0 %v426, 1
      %v431 = vpop.permute.xlu0 %430
      %432 = vrot.lane.b32.xlu0 %v427, 1
      %v433 = vpop.permute.xlu0 %432
      %vm434 = vcmp.lt.s32.totalorder %v362, 1
      %v435 = vsel %vm434, %v431, %v433
      %v436 = vsel %vm434, %v433, %v431
      %v437 = vlaneseq
      %v438 = vshrl.u32 %v437, 7
      %v439 = vsub.s32 3, %v438
      %v440 = vrot.slane %v257, %v439
      %v441 = vlaneseq
      %v442 = vshrl.u32 %v441, 7
      %v443 = vsub.s32 3, %v442
      %v444 = vrot.slane %v258, %v443
      %v445 = vmul.f32 %v436, %v440
      %v446 = vmul.f32 %v435, %v444
      %v447 = vadd.f32 %v424, %v445
      %v448 = vadd.f32 %v425, %v446
      %v451 = vrot.slane %v347, 2
      %v452 = vrot.slane %v349, 2
      %455 = vrot.lane.b32.xlu0 %v451, 127
      %v456 = vpop.permute.xlu0 %455
      %457 = vrot.lane.b32.xlu0 %v452, 127
      %v458 = vpop.permute.xlu0 %457
      %vm459 = vcmp.lt.s32.totalorder %v362, 127
      %v460 = vsel %vm459, %v456, %v458
      %v461 = vsel %vm459, %v458, %v456
      %v462 = vlaneseq
      %v463 = vshrl.u32 %v462, 7
      %v464 = vsub.s32 5, %v463
      %v465 = vrot.slane %v257, %v464
      %v466 = vlaneseq
      %v467 = vshrl.u32 %v466, 7
      %v468 = vsub.s32 5, %v467
      %v469 = vrot.slane %v258, %v468
      %v470 = vmul.f32 %v460, %v465
      %v471 = vmul.f32 %v461, %v469
      %v472 = vadd.f32 %v447, %v470
      %v473 = vadd.f32 %v448, %v471
      %v474 = vrot.slane %v347, 4
      %v475 = vrot.slane %v349, 4
      %478 = vrot.lane.b32.xlu0 %v474, 113
      %v479 = vpop.permute.xlu0 %478
      %480 = vrot.lane.b32.xlu0 %v475, 113
      %v481 = vpop.permute.xlu0 %480
      %vm482 = vcmp.lt.s32.totalorder %v362, 113
      %v483 = vsel %vm482, %v479, %v481
      %v484 = vsel %vm482, %v481, %v479
      %v485 = vlaneseq
      %v486 = vshrl.u32 %v485, 7
      %v487 = vsub.s32 6, %v486
      %v488 = vrot.slane %v257, %v487
      %v489 = vlaneseq
      %v490 = vshrl.u32 %v489, 7
      %v491 = vsub.s32 6, %v490
      %v492 = vrot.slane %v258, %v491
      %v493 = vmul.f32 %v483, %v488
      %v494 = vmul.f32 %v484, %v492
      %v495 = vadd.f32 %v472, %v493
      %v496 = vadd.f32 %v473, %v494
      %v497 = vrot.slane %v347, 6
      %v498 = vrot.slane %v349, 6
      %501 = vrot.lane.b32.xlu0 %v497, 112
      %v502 = vpop.permute.xlu0 %501
      %503 = vrot.lane.b32.xlu0 %v498, 112
      %v504 = vpop.permute.xlu0 %503
      %vm505 = vcmp.lt.s32.totalorder %v362, 112
      %v506 = vsel %vm505, %v502, %v504
      %v507 = vsel %vm505, %v504, %v502
      %v508 = vlaneseq
      %v509 = vshrl.u32 %v508, 7
      %v510 = vsub.s32 7, %v509
      %v511 = vrot.slane %v257, %v510
      %v512 = vlaneseq
      %v513 = vshrl.u32 %v512, 7
      %v514 = vsub.s32 7, %v513
      %v515 = vrot.slane %v258, %v514
      %v516 = vmul.f32 %v506, %v511
      %v517 = vmul.f32 %v507, %v515
      %v518 = vadd.f32 %v495, %v516
      %v519 = vadd.f32 %v496, %v517
      %520 = vrot.lane.b32.xlu0 %v353, 111
      %v521 = vpop.permute.xlu0 %520
      %522 = vrot.lane.b32.xlu0 %v355, 111
      %v523 = vpop.permute.xlu0 %522
      %vm524 = vcmp.lt.s32.totalorder %v362, 111
      %v525 = vsel %vm524, %v521, %v523
      %v526 = vsel %vm524, %v523, %v521
      %v527 = vlaneseq
      %v528 = vshrl.u32 %v527, 7
      %v529 = vsub.s32 0, %v528
      %v530 = vrot.slane %v259, %v529
      %v531 = vlaneseq
      %v532 = vshrl.u32 %v531, 7
      %v533 = vsub.s32 0, %v532
      %v534 = vrot.slane %v260, %v533
      %v535 = vmul.f32 %v525, %v530
      %v536 = vmul.f32 %v526, %v534
      %v537 = vadd.f32 %v518, %v535
      %v538 = vadd.f32 %v519, %v536
      %v539 = vld [vmem:[%s3] sm:$0x3]
      %541 = vset.pattern.permute.xlu0 0
      %542 = vperm.xlu0 %541, %v539
      %v543 = vpop.permute.xlu0 %542
      %v545 = vadd.f32 %v537, %v543
      %v546 = vadd.f32 %v538, %v543
      %v547 = vmax.f32 %v545, 0.0
      %v548 = vmax.f32 %v546, 0.0
      %v549 = vld [vmem:[%s4] sm:$0xff]
      %v550 = vld [vmem:[%s4 + $0x8] sm:$0x1]
      %vm551 = vcmask 15360
      %v553 = vsel %vm551, %v549, 0
      %v556 = vsel %vm551, %v550, 0
      %vm558 = vcmask 1041408
      %v560 = vsel %vm558, %v547, 0
      %v563 = vsel %vm558, %v548, 0
      %565 = vmatprep.subr.mxu0 %v563
      %566 = vmatpush1.msra.mxu0 %v560
      %567 = vmatprep.subr.mxu0 0.0
      %568 = vmatpush1.msra.mxu0 0.0
      %569 = vmatprep.subr.mxu0 0.0
      %570 = vmatpush1.msra.mxu0 0.0
      %571 = vmatprep.subr.mxu0 0.0
      %572 = vmatpush1.msra.mxu0 0.0
      %573 = vmatprep.subr.mxu0 0.0
      %574 = vmatpush1.msra.mxu0 0.0
      %575 = vmatprep.subr.mxu0 0.0
      %576 = vmatpush1.msra.mxu0 0.0
      %577 = vmatprep.subr.mxu0 0.0
      %578 = vmatpush1.msra.mxu0 0.0
      %579 = vmatprep.subr.mxu0 0.0
      %580 = vmatpush1.msra.mxu0 0.0
      %581 = vmatprep.subr.mxu0 0.0
      %582 = vmatpush1.msra.mxu0 0.0
      %583 = vmatprep.subr.mxu0 0.0
      %584 = vmatpush1.msra.mxu0 0.0
      %585 = vmatprep.subr.mxu0 0.0
      %586 = vmatpush1.msra.mxu0 0.0
      %587 = vmatprep.subr.mxu0 0.0
      %588 = vmatpush1.msra.mxu0 0.0
      %589 = vmatprep.subr.mxu0 0.0
      %590 = vmatpush1.msra.mxu0 0.0
      %591 = vmatprep.subr.mxu0 0.0
      %592 = vmatpush1.msra.mxu0 0.0
      %593 = vmatprep.subr.mxu0 0.0
      %594 = vmatpush1.msra.mxu0 0.0
      %595 = vmatprep.subr.mxu0 0.0
      %596 = vmatpush1.msra.mxu0 0.0
      %597 = vmatprep.subr.mxu0 0.0
      %598 = vmatpush1.msra.mxu0 0.0
      %599 = vmatprep.subr.mxu0 0.0
      %600 = vmatpush1.msra.mxu0 0.0
      %601 = vmatprep.subr.mxu0 0.0
      %602 = vmatpush1.msra.mxu0 0.0
      %603 = vmatprep.subr.mxu0 0.0
      %604 = vmatpush1.msra.mxu0 0.0
      %605 = vmatprep.subr.mxu0 0.0
      %606 = vmatpush1.msra.mxu0 0.0
      %607 = vmatprep.subr.mxu0 0.0
      %608 = vmatpush1.msra.mxu0 0.0
      %609 = vmatprep.subr.mxu0 0.0
      %610 = vmatpush1.msra.mxu0 0.0
      %611 = vmatprep.subr.mxu0 0.0
      %612 = vmatpush1.msra.mxu0 0.0
      %613 = vmatprep.subr.mxu0 0.0
      %614 = vmatpush1.msra.mxu0 0.0
      %615 = vmatprep.subr.mxu0 0.0
      %616 = vmatpush1.msra.mxu0 0.0
      %617 = vmatprep.subr.mxu0 0.0
      %618 = vmatpush1.msra.mxu0 0.0
      %619 = vmatprep.subr.mxu0 0.0
      %620 = vmatpush1.msra.mxu0 0.0
      %621 = vmatprep.subr.mxu0 0.0
      %622 = vmatpush1.msra.mxu0 0.0
      %623 = vmatprep.subr.mxu0 0.0
      %624 = vmatpush1.msra.mxu0 0.0
      %625 = vmatprep.subr.mxu0 0.0
      %626 = vmatpush1.msra.mxu0 0.0
      %627 = vmatprep.subr.mxu0 0.0
      %628 = vmatpush1.msra.mxu0 0.0
      %629 = vmatprep.mubr.f32.mxu0 0.0
      %630 = vmatmul.mubr.f32.gmra.mrb[0].mxu0 %v553
      %v631 = vpop.f32.mrb[0].mxu0
      %v632 = vadd.f32 0.0, %v631
      %v633 = vpop.f32.mrb[0].mxu0
      %v634 = vadd.f32 0.0, %v633
      %635 = vmatprep.mubr.f32.mxu0 0.0
      %636 = vmatmul.mubr.f32.gmra.mrb[0].mxu0 %v556
      %v637 = vpop.f32.mrb[0].mxu0
      %v638 = vadd.f32 0.0, %v637
      %v639 = vpop.f32.mrb[0].mxu0
      %v640 = vadd.f32 0.0, %v639
      %641 = vdwg.mxu0
      %642 = vrot.lane.b32.xlu0 %v632, 17
      %v643 = vpop.permute.xlu0 %642
      %644 = vrot.lane.b32.xlu0 %v634, 17
      %v645 = vpop.permute.xlu0 %644
      %v646 = vsel %vm363, %v643, %v645
      %v647 = vsel %vm363, %v645, %v643
      %v648 = vmul.f32 %v647, %v257
      %v649 = vmul.f32 %v646, %v258
      %v652 = vrot.slane %v648, 4
      %v653 = vrot.slane %v649, 4
      %v656 = vadd.f32 %v632, %v652
      %v657 = vadd.f32 %v634, %v653
      %v660 = vrot.slane %v632, 1
      %v661 = vrot.slane %v634, 1
      %664 = vrot.lane.b32.xlu0 %v660, 16
      %v665 = vpop.permute.xlu0 %664
      %666 = vrot.lane.b32.xlu0 %v661, 16
      %v667 = vpop.permute.xlu0 %666
      %v668 = vsel %vm388, %v665, %v667
      %v669 = vsel %vm388, %v667, %v665
      %v672 = vrot.slane %v257, 1
      %v673 = vrot.slane %v258, 1
      %v676 = vmul.f32 %v669, %v672
      %v677 = vmul.f32 %v668, %v673
      %v680 = vrot.slane %v676, 4
      %v681 = vrot.slane %v677, 4
      %v684 = vadd.f32 %v656, %v680
      %v685 = vadd.f32 %v657, %v681
      %v686 = vrot.slane %v632, 2
      %v687 = vrot.slane %v634, 2
      %690 = vrot.lane.b32.xlu0 %v686, 15
      %v691 = vpop.permute.xlu0 %690
      %692 = vrot.lane.b32.xlu0 %v687, 15
      %v693 = vpop.permute.xlu0 %692
      %v694 = vsel %vm411, %v691, %v693
      %v695 = vsel %vm411, %v693, %v691
      %v696 = vrot.slane %v257, 2
      %v697 = vrot.slane %v258, 2
      %v700 = vmul.f32 %v695, %v696
      %v701 = vmul.f32 %v694, %v697
      %v704 = vrot.slane %v700, 4
      %v705 = vrot.slane %v701, 4
      %v708 = vadd.f32 %v684, %v704
      %v709 = vadd.f32 %v685, %v705
      %v710 = vrot.slane %v632, 3
      %v711 = vrot.slane %v634, 3
      %714 = vrot.lane.b32.xlu0 %v710, 1
      %v715 = vpop.permute.xlu0 %714
      %716 = vrot.lane.b32.xlu0 %v711, 1
      %v717 = vpop.permute.xlu0 %716
      %v718 = vsel %vm434, %v715, %v717
      %v719 = vsel %vm434, %v717, %v715
      %v720 = vrot.slane %v257, 3
      %v721 = vrot.slane %v258, 3
      %v724 = vmul.f32 %v719, %v720
      %v725 = vmul.f32 %v718, %v721
      %v728 = vrot.slane %v724, 4
      %v729 = vrot.slane %v725, 4
      %v732 = vadd.f32 %v708, %v728
      %v733 = vadd.f32 %v709, %v729
      %v734 = vrot.slane %v632, 5
      %v735 = vrot.slane %v634, 5
      %738 = vrot.lane.b32.xlu0 %v734, 127
      %v739 = vpop.permute.xlu0 %738
      %740 = vrot.lane.b32.xlu0 %v735, 127
      %v741 = vpop.permute.xlu0 %740
      %v742 = vsel %vm459, %v739, %v741
      %v743 = vsel %vm459, %v741, %v739
      %v744 = vrot.slane %v257, 5
      %v745 = vrot.slane %v258, 5
      %v748 = vmul.f32 %v742, %v744
      %v749 = vmul.f32 %v743, %v745
      %v752 = vrot.slane %v748, 4
      %v753 = vrot.slane %v749, 4
      %v756 = vadd.f32 %v732, %v752
      %v757 = vadd.f32 %v733, %v753
      %v758 = vrot.slane %v632, 6
      %v759 = vrot.slane %v634, 6
      %762 = vrot.lane.b32.xlu0 %v758, 113
      %v763 = vpop.permute.xlu0 %762
      %764 = vrot.lane.b32.xlu0 %v759, 113
      %v765 = vpop.permute.xlu0 %764
      %v766 = vsel %vm482, %v763, %v765
      %v767 = vsel %vm482, %v765, %v763
      %v768 = vrot.slane %v257, 6
      %v769 = vrot.slane %v258, 6
      %v772 = vmul.f32 %v766, %v768
      %v773 = vmul.f32 %v767, %v769
      %v776 = vrot.slane %v772, 4
      %v777 = vrot.slane %v773, 4
      %v780 = vadd.f32 %v756, %v776
      %v781 = vadd.f32 %v757, %v777
      %v782 = vrot.slane %v632, 7
      %v783 = vrot.slane %v634, 7
      %786 = vrot.lane.b32.xlu0 %v782, 112
      %v787 = vpop.permute.xlu0 %786
      %788 = vrot.lane.b32.xlu0 %v783, 112
      %v789 = vpop.permute.xlu0 %788
      %v790 = vsel %vm505, %v787, %v789
      %v791 = vsel %vm505, %v789, %v787
      %v792 = vrot.slane %v257, 7
      %v793 = vrot.slane %v258, 7
      %v796 = vmul.f32 %v790, %v792
      %v797 = vmul.f32 %v791, %v793
      %v800 = vrot.slane %v796, 4
      %v801 = vrot.slane %v797, 4
      %v804 = vadd.f32 %v780, %v800
      %v805 = vadd.f32 %v781, %v801
      %806 = vrot.lane.b32.xlu0 %v638, 111
      %v807 = vpop.permute.xlu0 %806
      %808 = vrot.lane.b32.xlu0 %v640, 111
      %v809 = vpop.permute.xlu0 %808
      %v810 = vsel %vm524, %v807, %v809
      %v811 = vsel %vm524, %v809, %v807
      %v812 = vmul.f32 %v810, %v259
      %v813 = vmul.f32 %v811, %v260
      %v816 = vrot.slane %v812, 4
      %v817 = vrot.slane %v813, 4
      %v820 = vadd.f32 %v804, %v816
      %v821 = vadd.f32 %v805, %v817
      %s822 = sld [smem:[#allocation2]]
      %v823 = vstv %s822
      %v824 = vadd.f32 %v820, %v823
      %v825 = vadd.f32 %v821, %v823
      %v826 = vxor.u32 %v824, 2147483648
      %v827 = vxor.u32 %v825, 2147483648
      %v828 = vmul.f32 %v826, 1.442695
      %v829 = vpow.pop %v828
      %v830 = vmul.f32 %v827, 1.442695
      %v831 = vpow.pop %v830
      %v832 = vadd.f32 %v829, 1.0
      %v833 = vadd.f32 %v831, 1.0
      %v834 = vrcp.pop %v832
      %v835 = vmul.f32 1.0, %v834
      %v836 = vrcp.pop %v833
      %v837 = vmul.f32 1.0, %v836
      %v838 = vlaneseq
      %v839 = vshrl.u32 %v838, 7
      %v840 = vsub.s32 4, %v839
      %v841 = vrot.slane %v835, %v840
      %v842 = vlaneseq
      %v843 = vshrl.u32 %v842, 7
      %v844 = vsub.s32 4, %v843
      %v845 = vrot.slane %v837, %v844
      %v846 = vmul.f32 %v253, %v841
      %v847 = vmul.f32 %v254, %v845
      %v848 = vmul.f32 %v255, %v841
      %v849 = vmul.f32 %v256, %v845
      %850 = vst [vmem:[%s252] sm:$0xff] %v846
      %851 = vst [vmem:[%s252 + $0x8] sm:$0xff] %v847
      %852 = vst [vmem:[%s252 + $0x10] sm:$0xff] %v848
      %853 = vst [vmem:[%s252 + $0x18] sm:$0xff] %v849
      %p854 = scmp.lt.s32.totalorder %s18, 1
      %s855 = scalar_select %p854, %s18, 1
      %s856 = smul.addr %s855, 4
      %s857 = smul.addr %s856, 8
      %s858 = scalar_lea.vmem %s6, %s857
      // Predicated region
      $region45: #{pa_layer.1} parent=43 // pred_check
        %p859 = pneg %p167
      $region46: #{pa_layer.1} parent=43 // pred_check_branch
        %861 = sbr.rel (%p859) target = $region48
      $region47: #{pa_layer.1} parent=43 // pred_region
        _
      $region48: #{pa_layer.1} parent=43 // pred_fallthru
        _
    $region44: #{pa_layer.1} parent=5 // pred_fallthru
      _
    %p862 = scmp.le.s32.totalorder 2, %s13
    // Predicated region
    $region49: #{pa_layer.1} parent=5 // pred_check
      %p863 = pneg %p862
    $region50: #{pa_layer.1} parent=5 // pred_check_branch
      %865 = sbr.rel (%p863) target = $region52
    $region51: #{pa_layer.1} parent=5 // pred_region
      %s866 = ssub.s32 %s13, 2
      // Predicated region
      $region53: #{pa_layer.1} parent=51 // pred_check
        %p867 = pneg %p173
      $region54: #{pa_layer.1} parent=51 // pred_check_branch
        %869 = sbr.rel (%p867) target = $region56
      $region55: #{pa_layer.1} parent=51 // pred_region
        %p870 = scmp.lt.s32.totalorder %s19, 1
        %s871 = scalar_select %p870, %s19, 1
        %s872 = smul.addr %s871, 4
        %s873 = smul.addr %s872, 8
        %s874 = scalar_lea.vmem %s6, %s873
      $region56: #{pa_layer.1} parent=51 // pred_fallthru
        _
    $region52: #{pa_layer.1} parent=5 // pred_fallthru
      _
  $region6: #{pa_layer.1} parent=0 // loop_footer
    %s17 = sadd.s32 1, %s13
  $region7: #{pa_layer.1} parent=0 // loop_footer_branch
    %12 = sbr.rel target = $region3
  $region8: #{pa_layer.1} parent=0 // loop_exit
    _

</llo_original>
